<compile_context>
chip_gen: v7x
topology: tpu7x:2x2x1
jax: 0.10.0
libtpu: 0.0.40
codegen_flags: <defaults>
</compile_context>

<pallas_src>
import math
import functools

import jax
import jax.numpy as jnp
from jax import lax
from jax.experimental import pallas as pl
from jax.experimental.pallas import tpu as pltpu


_INV_SQRT2 = 1.0 / math.sqrt(2.0)


def _mlp_encoder_kernel(x_ref, w1_ref, b1_ref, gamma_ref, beta_ref,
                        w2_ref, b2_ref, o_ref, *, approximate_gelu):
    """One batch tile: Linear -> LayerNorm -> GELU -> Linear (f32 math, bf16 MXU)."""
    # Feed the MXU bf16 (weights are pre-cast in prepare_params); accumulate f32.
    x = x_ref[...].astype(jnp.bfloat16)

    # Linear 1 (MXU, bf16 x bf16 -> f32 accumulate).
    h = jnp.dot(x, w1_ref[...], preferred_element_type=jnp.float32) + b1_ref[...]

    # LayerNorm over the hidden dim — centered two-pass variance (numerically
    # stable, matches the reference); rsqrt goes to the EUP (otherwise idle).
    mean = jnp.mean(h, axis=-1, keepdims=True)
    centered = h - mean
    var = jnp.mean(centered * centered, axis=-1, keepdims=True)
    hn = centered * lax.rsqrt(var + 1e-5)            # eps = nn.LayerNorm default
    hn = hn * gamma_ref[...] + beta_ref[...]

    if approximate_gelu:
        # tanh-approx GELU lands on the EUP slot, freeing VALU cycles.
        g = jax.nn.gelu(hn, approximate=True)
    else:
        # Exact erf-GELU — matches PyTorch nn.GELU() default numerics.
        g = 0.5 * hn * (1.0 + lax.erf(hn * _INV_SQRT2))

    # Linear 2 (MXU, bf16). w2/b2 were zero-padded once to a lane-dense width
    # (multiple of 128) so this store is an unmasked full-lane vst.
    out = jnp.dot(g.astype(jnp.bfloat16), w2_ref[...],
                  preferred_element_type=jnp.float32) + b2_ref[...]

    # is_norm=False path: no sigmoid.
    o_ref[...] = out.astype(o_ref.dtype)


def prepare_params(w1, b1, gamma, beta, w2, b2):
    """One-time parameter preprocessing (hoisted out of the per-call path).

    * casts matmul weights to bf16 (MXU-native on v5e/v6e/v7x),
    * zero-pads w2/b2 so the kernel's output width is a multiple of 128 lanes,
    * reshapes 1-D vectors to (1, dim) for clean 2-D VMEM broadcasting.
    """
    Din, H = w1.shape
    H2, Z = w2.shape
    assert H2 == H
    Zp = ((Z + 127) // 128) * 128
    if Zp != Z:
        w2p = jnp.zeros((H, Zp), w2.dtype).at[:, :Z].set(w2)
        b2p = jnp.zeros((Zp,), b2.dtype).at[:Z].set(b2)
    else:
        w2p, b2p = w2, b2
    return {
        "w1": w1.astype(jnp.bfloat16),
        "b1": b1.reshape(1, H).astype(jnp.float32),
        "gamma": gamma.reshape(1, H).astype(jnp.float32),
        "beta": beta.reshape(1, H).astype(jnp.float32),
        "w2": w2p.astype(jnp.bfloat16),
        "b2": b2p.reshape(1, Zp).astype(jnp.float32),
        "z_dim": Z,                         # Python int (static)
    }


def _pick_tile_b(B):
    if B <= 256:
        return B            # one grid step: per-step overhead dominates here
    # Larger B: pick the largest sublane-aligned divisor <= 1024 so the
    # "parallel" batch axis has >= 2 steps (v7x dual-TC) with big tiles.
    for t in (1024, 512, 256, 128, 64, 32, 16, 8):
        if B % t == 0:
            return t
    return B                # awkward B: fall back to one whole-batch step


def mlp_encoder(x, params, *, tile_b=None, approximate_gelu=False,
                return_padded=False):
    """Forward pass of MLP_Encoder (is_norm=False) with prepared params."""
    B, Din = x.shape
    w1, b1 = params["w1"], params["b1"]
    gamma, beta = params["gamma"], params["beta"]
    w2, b2 = params["w2"], params["b2"]
    Z = params["z_dim"]
    H = w1.shape[1]
    Zp = w2.shape[1]
    assert w1.shape[0] == Din

    if tile_b is None:
        tile_b = _pick_tile_b(B)
    assert B % tile_b == 0

    # Constants live whole-array in VMEM (fetched once, no double-buffering);
    # only the x tile and output tile are pipelined.
    const_spec = pl.BlockSpec(memory_space=pltpu.MemorySpace.VMEM)
    # TODO(synk): for production Din/H, K-tile w1 (and the second matmul's H
    # dim) over an "arbitrary" grid axis with an f32 VMEM accumulator instead
    # of whole-weight residency (v7x has only 64 MiB VMEM per TensorCore).

    # Explicit VMEM budget (v5e's default scoped limit is only 16 MiB).
    resident = int(
        w1.size * 2 + w2.size * 2 +
        (b1.size + gamma.size + beta.size + b2.size) * 4 +
        2 * tile_b * Din * x.dtype.itemsize +        # double-buffered x tiles
        2 * tile_b * Zp * x.dtype.itemsize +         # double-buffered out tiles
        6 * tile_b * H * 4)                          # kernel intermediates
    vmem_limit = int(min(max(2 * resident, 32 << 20), 56 << 20))

    kernel = functools.partial(_mlp_encoder_kernel,
                               approximate_gelu=approximate_gelu)

    out_padded = pl.pallas_call(
        kernel,
        out_shape=jax.ShapeDtypeStruct((B, Zp), x.dtype),
        grid_spec=pltpu.PrefetchScalarGridSpec(
            num_scalar_prefetch=0,
            grid=(B // tile_b,),
            in_specs=[
                pl.BlockSpec((tile_b, Din), lambda i: (i, 0)),  # x (pipelined)
                const_spec,   # W1 (bf16)
                const_spec,   # b1
                const_spec,   # LN gamma
                const_spec,   # LN beta
                const_spec,   # W2 (bf16, lane-padded)
                const_spec,   # b2 (lane-padded)
            ],
            out_specs=pl.BlockSpec((tile_b, Zp), lambda i: (i, 0)),
        ),
        compiler_params=pltpu.CompilerParams(
            dimension_semantics=("parallel",),
            vmem_limit_bytes=vmem_limit),
    )(x, w1, b1, gamma, beta, w2, b2)

    if return_padded:
        return out_padded          # lane-dense (B, Zp); caller slices downstream
    return out_padded[:, :Z]


def _reference_f32(x, w1, b1, gamma, beta, w2, b2):
    """Full-f32 PyTorch-semantics reference."""
    h = x @ w1 + b1
    mean = jnp.mean(h, axis=-1, keepdims=True)
    var = jnp.mean((h - mean) ** 2, axis=-1, keepdims=True)
    hn = (h - mean) / jnp.sqrt(var + 1e-5) * gamma + beta
    g = 0.5 * hn * (1.0 + lax.erf(hn / jnp.sqrt(2.0)))
    return g @ w2 + b2


def _reference_matched(x, w1, b1, gamma, beta, w2, b2):
    """Reference with the kernel's precision: bf16 MXU inputs, f32 math."""
    h = jnp.dot(x.astype(jnp.bfloat16), w1.astype(jnp.bfloat16),
                preferred_element_type=jnp.float32) + b1
    mean = jnp.mean(h, axis=-1, keepdims=True)
    c = h - mean
    var = jnp.mean(c * c, axis=-1, keepdims=True)
    hn = c * lax.rsqrt(var + 1e-5) * gamma + beta
    g = 0.5 * hn * (1.0 + lax.erf(hn * _INV_SQRT2))
    return jnp.dot(g.astype(jnp.bfloat16), w2.astype(jnp.bfloat16),
                   preferred_element_type=jnp.float32) + b2


if __name__ == "__main__":
    # Small shapes consistent with the module: batch=16, input_dim=32,
    # hidden_dim=64, z_dim=16.
    B, Din, H, Z = 16, 32, 64, 16
    key = jax.random.PRNGKey(0)
    kx, k1, kb1, k2, kb2 = jax.random.split(key, 5)

    x = jax.random.normal(kx, (B, Din), dtype=jnp.float32)

    # Deterministic parameter init (PyTorch-Linear-style uniform bounds).
    lim1 = 1.0 / math.sqrt(Din)
    w1 = jax.random.uniform(k1, (Din, H), jnp.float32, -lim1, lim1)
    b1 = jax.random.uniform(kb1, (H,), jnp.float32, -lim1, lim1)
    gamma = jnp.ones((H,), jnp.float32)   # nn.LayerNorm default weight
    beta = jnp.zeros((H,), jnp.float32)   # nn.LayerNorm default bias
    lim2 = 1.0 / math.sqrt(H)
    w2 = jax.random.uniform(k2, (H, Z), jnp.float32, -lim2, lim2)
    b2 = jax.random.uniform(kb2, (Z,), jnp.float32, -lim2, lim2)

    # One-time parameter preprocessing (hoisted out of the per-call path).
    params = prepare_params(w1, b1, gamma, beta, w2, b2)

    out = mlp_encoder(x, params)
    out = jax.block_until_ready(out)
    assert out.shape == (B, Z)

    # Tight check against a reference with matched (bf16-MXU) precision.
    ref_m = _reference_matched(x, w1, b1, gamma, beta, w2, b2)
    assert jnp.allclose(out, ref_m, atol=2e-3, rtol=2e-3), \
        "mismatch vs matched-precision reference"

    # Sanity check against the full-f32 PyTorch-semantics reference
    # (bf16 MXU inputs cost a few 1e-3 absolute at these magnitudes).
    ref_f32 = _reference_f32(x, w1, b1, gamma, beta, w2, b2)
    assert jnp.allclose(out, ref_f32, atol=3e-2, rtol=3e-2), \
        "mismatch vs f32 reference"

    print("KERNEL_OK")
</pallas_src>

<mosaic_0001>
module attributes {stable_mosaic.version = 11 : i64} {
  func.func @_mlp_encoder_kernel(%arg0: i32, %arg1: memref<16x32xf32, #tpu.memory_space<vmem>>, %arg2: memref<32x64xbf16, #tpu.memory_space<vmem>>, %arg3: memref<1x64xf32, #tpu.memory_space<vmem>>, %arg4: memref<1x64xf32, #tpu.memory_space<vmem>>, %arg5: memref<1x64xf32, #tpu.memory_space<vmem>>, %arg6: memref<64x128xbf16, #tpu.memory_space<vmem>>, %arg7: memref<1x128xf32, #tpu.memory_space<vmem>>, %arg8: memref<16x128xf32, #tpu.memory_space<vmem>>) attributes {dimension_semantics = [#tpu.dimension_semantics<parallel>], iteration_bounds = array<i64: 1>, scalar_prefetch = 0 : i64, scratch_operands = 0 : i64, tpu.core_type = #tpu.core_type<tc>, window_params = [{transform_indices = @transform_0, window_bounds = array<i64: 16, 32>}, {pipeline_mode = #tpu.pipeline_mode<synchronous>, transform_indices = @transform_1, window_bounds = array<i64: 32, 64>}, {pipeline_mode = #tpu.pipeline_mode<synchronous>, transform_indices = @transform_2, window_bounds = array<i64: 1, 64>}, {pipeline_mode = #tpu.pipeline_mode<synchronous>, transform_indices = @transform_3, window_bounds = array<i64: 1, 64>}, {pipeline_mode = #tpu.pipeline_mode<synchronous>, transform_indices = @transform_4, window_bounds = array<i64: 1, 64>}, {pipeline_mode = #tpu.pipeline_mode<synchronous>, transform_indices = @transform_5, window_bounds = array<i64: 64, 128>}, {pipeline_mode = #tpu.pipeline_mode<synchronous>, transform_indices = @transform_6, window_bounds = array<i64: 1, 128>}, {transform_indices = @transform_7, window_bounds = array<i64: 16, 128>}]} {
    %c0 = arith.constant 0 : index
    %c0_0 = arith.constant 0 : index
    %0 = vector.load %arg1[%c0, %c0_0] : memref<16x32xf32, #tpu.memory_space<vmem>>, vector<16x32xf32>
    %1 = arith.truncf %0 : vector<16x32xf32> to vector<16x32xbf16>
    %c0_1 = arith.constant 0 : index
    %c0_2 = arith.constant 0 : index
    %2 = vector.load %arg2[%c0_1, %c0_2] : memref<32x64xbf16, #tpu.memory_space<vmem>>, vector<32x64xbf16>
    %cst = arith.constant dense<0.000000e+00> : vector<16x64xf32>
    %3 = tpu.matmul %1, %2, %cst {dimension_numbers = #tpu.dot_dimension_numbers<[1], [0], [0], [1], [0, 0, 1, 1], [], []>} : vector<16x32xbf16>, vector<32x64xbf16>, vector<16x64xf32> -> vector<16x64xf32>
    %c0_3 = arith.constant 0 : index
    %c0_4 = arith.constant 0 : index
    %4 = vector.load %arg3[%c0_3, %c0_4] : memref<1x64xf32, #tpu.memory_space<vmem>>, vector<1x64xf32>
    %5 = vector.broadcast %4 : vector<1x64xf32> to vector<16x64xf32>
    %6 = arith.addf %3, %5 : vector<16x64xf32>
    %cst_5 = arith.constant dense<0.000000e+00> : vector<16xf32>
    %7 = vector.multi_reduction <add>, %6, %cst_5 [1] : vector<16x64xf32> to vector<16xf32>
    %8 = vector.shape_cast %7 : vector<16xf32> to vector<16x1xf32>
    %cst_6 = arith.constant 6.400000e+01 : f32
    %9 = vector.broadcast %cst_6 : f32 to vector<16x1xf32>
    %10 = arith.divf %8, %9 : vector<16x1xf32>
    %11 = vector.broadcast %10 : vector<16x1xf32> to vector<16x64xf32>
    %12 = arith.subf %6, %11 : vector<16x64xf32>
    %13 = arith.mulf %12, %12 : vector<16x64xf32>
    %cst_7 = arith.constant dense<0.000000e+00> : vector<16xf32>
    %14 = vector.multi_reduction <add>, %13, %cst_7 [1] : vector<16x64xf32> to vector<16xf32>
    %15 = vector.shape_cast %14 : vector<16xf32> to vector<16x1xf32>
    %cst_8 = arith.constant 6.400000e+01 : f32
    %16 = vector.broadcast %cst_8 : f32 to vector<16x1xf32>
    %17 = arith.divf %15, %16 : vector<16x1xf32>
    %cst_9 = arith.constant 9.99999974E-6 : f32
    %18 = vector.broadcast %cst_9 : f32 to vector<16x1xf32>
    %19 = arith.addf %17, %18 : vector<16x1xf32>
    %20 = math.rsqrt %19 : vector<16x1xf32>
    %21 = vector.broadcast %20 : vector<16x1xf32> to vector<16x64xf32>
    %22 = arith.mulf %12, %21 : vector<16x64xf32>
    %c0_10 = arith.constant 0 : index
    %c0_11 = arith.constant 0 : index
    %23 = vector.load %arg4[%c0_10, %c0_11] : memref<1x64xf32, #tpu.memory_space<vmem>>, vector<1x64xf32>
    %24 = vector.broadcast %23 : vector<1x64xf32> to vector<16x64xf32>
    %25 = arith.mulf %22, %24 : vector<16x64xf32>
    %c0_12 = arith.constant 0 : index
    %c0_13 = arith.constant 0 : index
    %26 = vector.load %arg5[%c0_12, %c0_13] : memref<1x64xf32, #tpu.memory_space<vmem>>, vector<1x64xf32>
    %27 = vector.broadcast %26 : vector<1x64xf32> to vector<16x64xf32>
    %28 = arith.addf %25, %27 : vector<16x64xf32>
    %cst_14 = arith.constant 5.000000e-01 : f32
    %29 = vector.broadcast %cst_14 : f32 to vector<16x64xf32>
    %30 = arith.mulf %29, %28 : vector<16x64xf32>
    %cst_15 = arith.constant 0.707106769 : f32
    %31 = vector.broadcast %cst_15 : f32 to vector<16x64xf32>
    %32 = arith.mulf %28, %31 : vector<16x64xf32>
    %33 = math.erf %32 : vector<16x64xf32>
    %cst_16 = arith.constant 1.000000e+00 : f32
    %34 = vector.broadcast %cst_16 : f32 to vector<16x64xf32>
    %35 = arith.addf %34, %33 : vector<16x64xf32>
    %36 = arith.mulf %30, %35 : vector<16x64xf32>
    %37 = arith.truncf %36 : vector<16x64xf32> to vector<16x64xbf16>
    %c0_17 = arith.constant 0 : index
    %c0_18 = arith.constant 0 : index
    %38 = vector.load %arg6[%c0_17, %c0_18] : memref<64x128xbf16, #tpu.memory_space<vmem>>, vector<64x128xbf16>
    %cst_19 = arith.constant dense<0.000000e+00> : vector<16x128xf32>
    %39 = tpu.matmul %37, %38, %cst_19 {dimension_numbers = #tpu.dot_dimension_numbers<[1], [0], [0], [1], [0, 0, 1, 1], [], []>} : vector<16x64xbf16>, vector<64x128xbf16>, vector<16x128xf32> -> vector<16x128xf32>
    %c0_20 = arith.constant 0 : index
    %c0_21 = arith.constant 0 : index
    %40 = vector.load %arg7[%c0_20, %c0_21] : memref<1x128xf32, #tpu.memory_space<vmem>>, vector<1x128xf32>
    %41 = vector.broadcast %40 : vector<1x128xf32> to vector<16x128xf32>
    %42 = arith.addf %39, %41 : vector<16x128xf32>
    %c0_22 = arith.constant 0 : index
    %c0_23 = arith.constant 0 : index
    %43 = vector.load %arg8[%c0_22, %c0_23] : memref<16x128xf32, #tpu.memory_space<vmem>>, vector<16x128xf32>
    tpu.vector_store %arg8[%c0_22, %c0_23], %42 {strides = array<i32>} : memref<16x128xf32, #tpu.memory_space<vmem>>, vector<16x128xf32>,
    return
  }
  func.func @transform_0(%arg0: i32) -> (i32, i32) {
    %c0_i32 = arith.constant 0 : i32
    %c0_i32_0 = arith.constant 0 : i32
    return %arg0, %c0_i32 : i32, i32
  }
  func.func @transform_1(%arg0: i32) -> (i32, i32) {
    %c0_i32 = arith.constant 0 : i32
    %c0_i32_0 = arith.constant 0 : i32
    %c0_i32_1 = arith.constant 0 : i32
    return %c0_i32, %c0_i32_0 : i32, i32
  }
  func.func @transform_2(%arg0: i32) -> (i32, i32) {
    %c0_i32 = arith.constant 0 : i32
    %c0_i32_0 = arith.constant 0 : i32
    %c0_i32_1 = arith.constant 0 : i32
    return %c0_i32, %c0_i32_0 : i32, i32
  }
  func.func @transform_3(%arg0: i32) -> (i32, i32) {
    %c0_i32 = arith.constant 0 : i32
    %c0_i32_0 = arith.constant 0 : i32
    %c0_i32_1 = arith.constant 0 : i32
    return %c0_i32, %c0_i32_0 : i32, i32
  }
  func.func @transform_4(%arg0: i32) -> (i32, i32) {
    %c0_i32 = arith.constant 0 : i32
    %c0_i32_0 = arith.constant 0 : i32
    %c0_i32_1 = arith.constant 0 : i32
    return %c0_i32, %c0_i32_0 : i32, i32
  }
  func.func @transform_5(%arg0: i32) -> (i32, i32) {
    %c0_i32 = arith.constant 0 : i32
    %c0_i32_0 = arith.constant 0 : i32
    %c0_i32_1 = arith.constant 0 : i32
    return %c0_i32, %c0_i32_0 : i32, i32
  }
  func.func @transform_6(%arg0: i32) -> (i32, i32) {
    %c0_i32 = arith.constant 0 : i32
    %c0_i32_0 = arith.constant 0 : i32
    %c0_i32_1 = arith.constant 0 : i32
    return %c0_i32, %c0_i32_0 : i32, i32
  }
  func.func @transform_7(%arg0: i32) -> (i32, i32) {
    %c0_i32 = arith.constant 0 : i32
    %c0_i32_0 = arith.constant 0 : i32
    return %arg0, %c0_i32 : i32, i32
  }
}

</mosaic_0001>

<llo_original>
// kernel: tpu_custom_call.1
$region0: #{tpu_custom_call.1}
  #allocation0 [shape = 'u32[]', space=smem, size = 0x4, offset = 0x4, fixed_abs, tag = 'smem constant byte address 0x4 - core index']
  #allocation1 [shape = 'u32[144,128]{1,0:T(1,128)}', space=vmem, size = 0x12000, scoped, tag = 'internal scratch']
  %s0 = inlined_call_operand.hbm [shape: f32[16,32], index: 0, kind: input, shape index: {}]
  %s1 = inlined_call_operand.hbm [shape: bf16[32,64], index: 1, kind: input, shape index: {}]
  %s2 = inlined_call_operand.vmem [shape: f32[1,64], index: 2, kind: input, shape index: {}]
  %s3 = inlined_call_operand.vmem [shape: f32[1,64], index: 3, kind: input, shape index: {}]
  %s4 = inlined_call_operand.vmem [shape: f32[1,64], index: 4, kind: input, shape index: {}]
  %s5 = inlined_call_operand.hbm [shape: bf16[64,128], index: 5, kind: input, shape index: {}]
  %s6 = inlined_call_operand.vmem [shape: f32[1,128], index: 6, kind: input, shape index: {}]
  %s7 = inlined_call_operand.hbm [shape: f32[16,128], index: 7, kind: output, shape index: {}]
  %s8 = sld [smem:[#allocation0]]
  $region50: #{tpu_custom_call.1} parent=0
    _
  %s10 = ssub.s32 1, %s8
  %s11 = scalar_select 0, %s10, %s8
  $region1: #{tpu_custom_call.1} parent=0
    #allocation2 [shape = 'u8[8192]{0}', space=vmem, size = 0x2000, scoped, tag = 'input window, operand 0, single buffered']
    #allocation3 [shape = 's32[1]{0}', space=sflag, size = 0x4, scoped, tag = 'scoped memory for tpu_custom_call.1']
    #allocation4 [shape = 's32[1]{0}', space=sflag, size = 0x4, scoped, tag = 'scoped memory for tpu_custom_call.1']
    #allocation5 [shape = 'u8[8192]{0}', space=vmem, size = 0x2000, scoped, tag = 'input window, operand 1, single buffered']
    #allocation6 [shape = 's32[1]{0}', space=sflag, size = 0x4, scoped, tag = 'scoped memory for tpu_custom_call.1']
    #allocation7 [shape = 'u8[16384]{0}', space=vmem, size = 0x4000, scoped, tag = 'input window, operand 5, single buffered']
    #allocation8 [shape = 'u8[8192]{0}', space=vmem, size = 0x2000, scoped, tag = 'output window, operand 0, single buffered']
    %12 = vsyncpa [#allocation3], 0
    %13 = vsyncpa [#allocation6], 0
    %14 = vsyncpa [#allocation4], 0
    // Predicated region
    $region2: #{tpu_custom_call.1} parent=1 // pred_check
      _
    $region3: #{tpu_custom_call.1} parent=1 // pred_check_branch
      %16 = sbr.rel (0) target = $region5
    $region4: #{tpu_custom_call.1} parent=1 // pred_region
      %s18 = ssub.s32 256, 256
      %19 = vsyncadd [#allocation3], %s18
      %s20 = sshll.u32 [#allocation2], 4
      %s21 = int_to_ptr.vmem [resolvable:$true] %s20
      %26 = dma.hbm_to_vmem [thread:$0]  %s0, 256, %s21, [#allocation3], 128, 128, 8
    $region5: #{tpu_custom_call.1} parent=1 // pred_fallthru
      _
    // Predicated region
    $region6: #{tpu_custom_call.1} parent=1 // pred_check
      _
    $region7: #{tpu_custom_call.1} parent=1 // pred_check_branch
      %28 = sbr.rel (0) target = $region9
    $region8: #{tpu_custom_call.1} parent=1 // pred_region
      %s30 = ssub.s32 256, 256
      %31 = vsyncadd [#allocation6], %s30
      %s32 = sshll.u32 [#allocation5], 4
      %s33 = int_to_ptr.vmem [resolvable:$true] %s32
      %38 = dma.hbm_to_vmem [thread:$0]  %s1, 256, %s33, [#allocation6], 64, 64, 4
    $region9: #{tpu_custom_call.1} parent=1 // pred_fallthru
      _
    // Predicated region
    $region10: #{tpu_custom_call.1} parent=1 // pred_check
      _
    $region11: #{tpu_custom_call.1} parent=1 // pred_check_branch
      %40 = sbr.rel (0) target = $region13
    $region12: #{tpu_custom_call.1} parent=1 // pred_region
      _
    $region13: #{tpu_custom_call.1} parent=1 // pred_fallthru
      _
    // Predicated region
    $region14: #{tpu_custom_call.1} parent=1 // pred_check
      _
    $region15: #{tpu_custom_call.1} parent=1 // pred_check_branch
      %42 = sbr.rel (0) target = $region17
    $region16: #{tpu_custom_call.1} parent=1 // pred_region
      _
    $region17: #{tpu_custom_call.1} parent=1 // pred_fallthru
      _
    // Predicated region
    $region18: #{tpu_custom_call.1} parent=1 // pred_check
      _
    $region19: #{tpu_custom_call.1} parent=1 // pred_check_branch
      %44 = sbr.rel (0) target = $region21
    $region20: #{tpu_custom_call.1} parent=1 // pred_region
      _
    $region21: #{tpu_custom_call.1} parent=1 // pred_fallthru
      _
    // Predicated region
    $region22: #{tpu_custom_call.1} parent=1 // pred_check
      _
    $region23: #{tpu_custom_call.1} parent=1 // pred_check_branch
      %46 = sbr.rel (0) target = $region25
    $region24: #{tpu_custom_call.1} parent=1 // pred_region
      %s48 = ssub.s32 512, 512
      %49 = vsyncadd [#allocation6], %s48
      %s50 = sshll.u32 [#allocation7], 4
      %s51 = int_to_ptr.vmem [resolvable:$true] %s50
      %56 = dma.hbm_to_vmem [thread:$0]  %s5, 512, %s51, [#allocation6], 64, 64, 4
    $region25: #{tpu_custom_call.1} parent=1 // pred_fallthru
      _
    // Predicated region
    $region26: #{tpu_custom_call.1} parent=1 // pred_check
      _
    $region27: #{tpu_custom_call.1} parent=1 // pred_check_branch
      %58 = sbr.rel (0) target = $region29
    $region28: #{tpu_custom_call.1} parent=1 // pred_region
      _
    $region29: #{tpu_custom_call.1} parent=1 // pred_fallthru
      _
    // Predicated region
    $region30: #{tpu_custom_call.1} parent=1 // pred_check
      _
    $region31: #{tpu_custom_call.1} parent=1 // pred_check_branch
      %60 = sbr.rel (0) target = $region33
    $region32: #{tpu_custom_call.1} parent=1 // pred_region
      %61 = dma.done [#allocation3], 256
    $region33: #{tpu_custom_call.1} parent=1 // pred_fallthru
      _
    // Predicated region
    $region34: #{tpu_custom_call.1} parent=1 // pred_check
      _
    $region35: #{tpu_custom_call.1} parent=1 // pred_check_branch
      %63 = sbr.rel (0) target = $region37
    $region36: #{tpu_custom_call.1} parent=1 // pred_region
      %64 = dma.done [#allocation6], 256
    $region37: #{tpu_custom_call.1} parent=1 // pred_fallthru
      _
    // Predicated region
    $region38: #{tpu_custom_call.1} parent=1 // pred_check
      _
    $region39: #{tpu_custom_call.1} parent=1 // pred_check_branch
      %66 = sbr.rel (0) target = $region41
    $region40: #{tpu_custom_call.1} parent=1 // pred_region
      %67 = dma.done [#allocation6], 512
    $region41: #{tpu_custom_call.1} parent=1 // pred_fallthru
      _
    %v69 = vld [vmem:[#allocation2] sm:$0xff]
    %v70 = vld [vmem:[#allocation2 + $0x8] sm:$0xff]
    %v71 = vpack.c.bf16 %v70, %v69
    %v72 = vld [vmem:[#allocation5] sm:$0xf]
    %v73 = vld [vmem:[#allocation5 + $0x4] sm:$0xf]
    %v74 = vld [vmem:[#allocation5 + $0x8] sm:$0xf]
    %v75 = vld [vmem:[#allocation5 + $0xc] sm:$0xf]
    %v76 = vld [vmem:[%s2] sm:$0x1]
    %v78 = vlaneseq
    %v79 = vshrl.u32 %v78, 7
    %v80 = vsub.s32 0, %v79
    %v81 = vrot.slane %v76, %v80
    %v87 = vunpack.c.l.b16 %v72
    %v88 = vunpack.c.l.b16 %v73
    %v89 = vunpack.c.l.b16 %v74
    %v90 = vunpack.c.l.b16 %v75
    %v91 = vpack.c.b16 %v88, %v87
    %v92 = vpack.c.b16 %v90, %v89
    %vm95 = vcmask 261120
    %v97 = vsel %vm95, %v71, 0
    %99 = vmatprep.subr.bf16.mxu0 0
    %100 = vmatpush1.bf16.msra.mxu0 %v91
    %101 = vmatprep.subr.bf16.mxu0 0
    %102 = vmatpush1.bf16.msra.mxu0 %v92
    %103 = vmatprep.subr.bf16.mxu0 0
    %104 = vmatpush1.bf16.msra.mxu0 0
    %105 = vmatprep.subr.bf16.mxu0 0
    %106 = vmatpush1.bf16.msra.mxu0 0
    %107 = vmatprep.subr.bf16.mxu0 0
    %108 = vmatpush1.bf16.msra.mxu0 0
    %109 = vmatprep.subr.bf16.mxu0 0
    %110 = vmatpush1.bf16.msra.mxu0 0
    %111 = vmatprep.subr.bf16.mxu0 0
    %112 = vmatpush1.bf16.msra.mxu0 0
    %113 = vmatprep.subr.bf16.mxu0 0
    %114 = vmatpush1.bf16.msra.mxu0 0
    %115 = vmatprep.subr.bf16.mxu0 0
    %116 = vmatpush1.bf16.msra.mxu0 0
    %117 = vmatprep.subr.bf16.mxu0 0
    %118 = vmatpush1.bf16.msra.mxu0 0
    %119 = vmatprep.subr.bf16.mxu0 0
    %120 = vmatpush1.bf16.msra.mxu0 0
    %121 = vmatprep.subr.bf16.mxu0 0
    %122 = vmatpush1.bf16.msra.mxu0 0
    %123 = vmatprep.subr.bf16.mxu0 0
    %124 = vmatpush1.bf16.msra.mxu0 0
    %125 = vmatprep.subr.bf16.mxu0 0
    %126 = vmatpush1.bf16.msra.mxu0 0
    %127 = vmatprep.subr.bf16.mxu0 0
    %128 = vmatpush1.bf16.msra.mxu0 0
    %129 = vmatprep.subr.bf16.mxu0 0
    %130 = vmatpush1.bf16.msra.mxu0 0
    %131 = vmatprep.mubr.bf16.mxu0 0
    %132 = vmatmul.mubr.bf16.gmra.mrb[0].mxu0 %v97
    %v133 = vpop.f32.mrb[0].mxu0
    %v134 = vadd.f32 %v81, %v133
    %v135 = vpop.f32.mrb[0].mxu0
    %v136 = vpop.f32.mrb[0].mxu0
    %v137 = vadd.f32 %v81, %v136
    %v138 = vpop.f32.mrb[0].mxu0
    %139 = vdwg.mxu0
    %vm140 = vcmask 523264
    %v141 = vsel %vm140, %v134, 0.0
    %142 = vadd.xlane.f32.xlu0 %v141
    %v143 = vpop.xlane.xlu0 %142
    %v144 = vsel %vm140, %v137, 0.0
    %145 = vadd.xlane.f32.xlu0 %v144
    %v146 = vpop.xlane.xlu0 %145
    %v147 = vrcp.pop 64.0
    %v148 = vmul.f32 %v143, %v147
    %v149 = vmul.f32 %v146, %v147
    %v150 = vsub.f32 %v134, %v148
    %v151 = vsub.f32 %v137, %v149
    %v152 = vmul.f32 %v150, %v150
    %v153 = vmul.f32 %v151, %v151
    %v154 = vsel %vm140, %v152, 0.0
    %155 = vadd.xlane.f32.xlu0 %v154
    %v156 = vpop.xlane.xlu0 %155
    %v157 = vsel %vm140, %v153, 0.0
    %158 = vadd.xlane.f32.xlu0 %v157
    %v159 = vpop.xlane.xlu0 %158
    %v160 = vmul.f32 %v156, %v147
    %v161 = vmul.f32 %v159, %v147
    %v162 = vadd.f32 %v160, 1e-05
    %v163 = vadd.f32 %v161, 1e-05
    %v164 = vrsqrt.pop %v162
    %v165 = vrsqrt.pop %v163
    %v166 = vmul.f32 %v150, %v164
    %v167 = vmul.f32 %v151, %v165
    %v168 = vld [vmem:[%s3] sm:$0x1]
    %v170 = vlaneseq
    %v171 = vshrl.u32 %v170, 7
    %v172 = vsub.s32 0, %v171
    %v173 = vrot.slane %v168, %v172
    %v175 = vmul.f32 %v166, %v173
    %v176 = vmul.f32 %v167, %v173
    %v177 = vld [vmem:[%s4] sm:$0x1]
    %v179 = vlaneseq
    %v180 = vshrl.u32 %v179, 7
    %v181 = vsub.s32 0, %v180
    %v182 = vrot.slane %v177, %v181
    %v184 = vadd.f32 %v175, %v182
    %v185 = vadd.f32 %v176, %v182
    %v186 = vmul.f32 %v184, 0.5
    %v187 = vmul.f32 %v185, 0.5
    %v188 = vmul.f32 %v184, 0.70710677
    %v189 = vmul.f32 %v185, 0.70710677
    %v190 = verf.f32.pop %v188
    %v191 = verf.f32.pop %v189
    %v192 = vadd.f32 %v190, 1.0
    %v193 = vadd.f32 %v191, 1.0
    %v194 = vmul.f32 %v186, %v192
    %v195 = vmul.f32 %v187, %v193
    %v196 = vpack.c.bf16 %v195, %v194
    %v197 = vld [vmem:[#allocation7] sm:$0xf]
    %v198 = vld [vmem:[#allocation7 + $0x4] sm:$0xf]
    %v199 = vld [vmem:[#allocation7 + $0x8] sm:$0xf]
    %v200 = vld [vmem:[#allocation7 + $0xc] sm:$0xf]
    %v201 = vld [vmem:[#allocation7 + $0x10] sm:$0xf]
    %v202 = vld [vmem:[#allocation7 + $0x14] sm:$0xf]
    %v203 = vld [vmem:[#allocation7 + $0x18] sm:$0xf]
    %v204 = vld [vmem:[#allocation7 + $0x1c] sm:$0xf]
    %v205 = vld [vmem:[%s6] sm:$0x1]
    %v207 = vlaneseq
    %v208 = vshrl.u32 %v207, 7
    %v209 = vsub.s32 0, %v208
    %v210 = vrot.slane %v205, %v209
    %v220 = vunpack.c.l.b16 %v197
    %v221 = vunpack.c.l.b16 %v198
    %v222 = vunpack.c.l.b16 %v199
    %v223 = vunpack.c.l.b16 %v200
    %v224 = vunpack.c.l.b16 %v201
    %v225 = vunpack.c.l.b16 %v202
    %v226 = vunpack.c.l.b16 %v203
    %v227 = vunpack.c.l.b16 %v204
    %v228 = vpack.c.b16 %v221, %v220
    %v229 = vpack.c.b16 %v223, %v222
    %v230 = vpack.c.b16 %v225, %v224
    %v231 = vpack.c.b16 %v227, %v226
    %v237 = vsel %vm140, %v196, 0
    %239 = vmatprep.subr.bf16.mxu0 0
    %240 = vmatpush1.bf16.msra.mxu0 %v228
    %241 = vmatprep.subr.bf16.mxu0 0
    %242 = vmatpush1.bf16.msra.mxu0 %v229
    %243 = vmatprep.subr.bf16.mxu0 0
    %244 = vmatpush1.bf16.msra.mxu0 %v230
    %245 = vmatprep.subr.bf16.mxu0 0
    %246 = vmatpush1.bf16.msra.mxu0 %v231
    %247 = vmatprep.subr.bf16.mxu0 0
    %248 = vmatpush1.bf16.msra.mxu0 0
    %249 = vmatprep.subr.bf16.mxu0 0
    %250 = vmatpush1.bf16.msra.mxu0 0
    %251 = vmatprep.subr.bf16.mxu0 0
    %252 = vmatpush1.bf16.msra.mxu0 0
    %253 = vmatprep.subr.bf16.mxu0 0
    %254 = vmatpush1.bf16.msra.mxu0 0
    %255 = vmatprep.subr.bf16.mxu0 0
    %256 = vmatpush1.bf16.msra.mxu0 0
    %257 = vmatprep.subr.bf16.mxu0 0
    %258 = vmatpush1.bf16.msra.mxu0 0
    %259 = vmatprep.subr.bf16.mxu0 0
    %260 = vmatpush1.bf16.msra.mxu0 0
    %261 = vmatprep.subr.bf16.mxu0 0
    %262 = vmatpush1.bf16.msra.mxu0 0
    %263 = vmatprep.subr.bf16.mxu0 0
    %264 = vmatpush1.bf16.msra.mxu0 0
    %265 = vmatprep.subr.bf16.mxu0 0
    %266 = vmatpush1.bf16.msra.mxu0 0
    %267 = vmatprep.subr.bf16.mxu0 0
    %268 = vmatpush1.bf16.msra.mxu0 0
    %269 = vmatprep.subr.bf16.mxu0 0
    %270 = vmatpush1.bf16.msra.mxu0 0
    %271 = vmatprep.mubr.bf16.mxu0 0
    %272 = vmatmul.mubr.bf16.gmra.mrb[0].mxu0 %v237
    %v273 = vpop.f32.mrb[0].mxu0
    %v274 = vadd.f32 %v210, %v273
    %v275 = vpop.f32.mrb[0].mxu0
    %v276 = vpop.f32.mrb[0].mxu0
    %v277 = vadd.f32 %v210, %v276
    %v278 = vpop.f32.mrb[0].mxu0
    %279 = vdwg.mxu0
    %280 = vst [vmem:[#allocation8] sm:$0xff] %v274
    %281 = vst [vmem:[#allocation8 + $0x8] sm:$0xff] %v277
    // Predicated region
    $region42: #{tpu_custom_call.1} parent=1 // pred_check
      _
    $region43: #{tpu_custom_call.1} parent=1 // pred_check_branch
      %283 = sbr.rel (0) target = $region45
    $region44: #{tpu_custom_call.1} parent=1 // pred_region
      %s285 = ssub.s32 256, 256
      %286 = vsyncadd [#allocation4], %s285
      %s287 = sshll.u32 [#allocation8], 4
      %s288 = int_to_ptr.vmem [resolvable:$true] %s287
      %293 = dma.vmem_to_hbm [thread:$0]  %s288, 256, %s7, [#allocation4], 128, 128, 8
    $region45: #{tpu_custom_call.1} parent=1 // pred_fallthru
      _
    // Predicated region
    $region46: #{tpu_custom_call.1} parent=1 // pred_check
      _
    $region47: #{tpu_custom_call.1} parent=1 // pred_check_branch
      %295 = sbr.rel (0) target = $region49
    $region48: #{tpu_custom_call.1} parent=1 // pred_region
      %296 = dma.done [#allocation4], 256
    $region49: #{tpu_custom_call.1} parent=1 // pred_fallthru
      _
    %297 = vsyncpa [#allocation3], 1
    %298 = vsyncpa [#allocation6], 1
    %299 = vsyncpa [#allocation4], 1

</llo_original>
